<compile_context>
chip_gen: v7x
topology: tpu7x:2x2x1
jax: 0.10.0
libtpu: 0.0.40
codegen_flags: <defaults>
</compile_context>

<pallas_src>
import math
from functools import partial

import jax
import jax.numpy as jnp
from jax.experimental import pallas as pl
from jax.experimental.pallas import tpu as pltpu


def _layernorm(x, gamma, beta, eps=1e-5):
    # f32 statistics; eps matches torch.nn.LayerNorm default.
    mu = jnp.mean(x, axis=-1, keepdims=True)
    var = jnp.mean((x - mu) ** 2, axis=-1, keepdims=True)
    return (x - mu) * jax.lax.rsqrt(var + eps) * gamma + beta


def _gelu_exact(x):
    # Exact (erf-form) GELU, matching torch.nn.GELU().  erf is evaluated with
    # the Abramowitz-Stegun 7.1.26 rational approximation (|err| <= 1.5e-7,
    # i.e. at f32 noise level) using only exp / mul / add / where, so we never
    # depend on an erf lowering inside Mosaic.  exp runs on the EUP slot.
    z = x * 0.7071067811865476            # x / sqrt(2)
    az = jnp.abs(z)
    t = 1.0 / (1.0 + 0.3275911 * az)
    poly = t * (0.254829592 + t * (-0.284496736 + t * (1.421413741
           + t * (-1.453152027 + t * 1.061405429))))
    erf_abs = 1.0 - poly * jnp.exp(-az * az)
    erf = jnp.where(z >= 0, erf_abs, -erf_abs)
    return 0.5 * x * (1.0 + erf)


# ---------------- kernel 1: LN1 + QKV projections (head-major out) ----------
def ln_qkv_kernel(x_ref, g1_ref, b1_ref, wq_ref, wk_ref, wv_ref,
                  q_ref, k_ref, v_ref, *, heads, scale):
    x = x_ref[0].astype(jnp.float32)                        # (bs, D) f32
    dh = x.shape[1] // heads
    xn = _layernorm(x, g1_ref[...], b1_ref[...]).astype(wq_ref.dtype)   # bf16

    # Full-width (N = D) MXU matmuls in bf16 with f32 accumulation.
    q = jnp.dot(xn, wq_ref[...], preferred_element_type=jnp.float32) * scale
    k = jnp.dot(xn, wk_ref[...], preferred_element_type=jnp.float32)
    v = jnp.dot(xn, wv_ref[...], preferred_element_type=jnp.float32)
    q = q.astype(q_ref.dtype)
    k = k.astype(k_ref.dtype)
    v = v.astype(v_ref.dtype)

    # Head-split relayout happens exactly once here (static lane slices); the
    # attention / projection kernels then run on head-batched tiles with no
    # per-head loops, transposes or concats in their hot paths.
    for h in range(heads):
        sl = slice(h * dh, (h + 1) * dh)
        q_ref[0, h] = q[:, sl]
        k_ref[0, h] = k[:, sl]
        v_ref[0, h] = v[:, sl]


# ---------------- kernel 2: flash attention (KV-tiled, heads batched) -------
def flash_attn_kernel(q_ref, k_ref, v_ref, o_ref, m_sc, l_sc, acc_sc):
    ki = pl.program_id(2)

    @pl.when(ki == 0)
    def _():
        m_sc[...] = jnp.full(m_sc.shape, -jnp.inf, jnp.float32)
        l_sc[...] = jnp.zeros(l_sc.shape, jnp.float32)
        acc_sc[...] = jnp.zeros(acc_sc.shape, jnp.float32)

    q = q_ref[0]                                            # (heads, bq, dh) bf16
    k = k_ref[0]                                            # (heads, bk, dh) bf16
    v = v_ref[0]                                            # (heads, bk, dh) bf16

    # All heads in one batched contraction; dh is contracted on both operands
    # so there is no explicit k.T (no XLU transpose). f32 accumulation on MXU.
    s = jnp.einsum("hqd,hkd->hqk", q, k, preferred_element_type=jnp.float32)

    m_prev = m_sc[...]
    m_new = jnp.maximum(m_prev, s.max(axis=-1, keepdims=True))
    alpha = jnp.exp(m_prev - m_new)
    p = jnp.exp(s - m_new)
    l_sc[...] = alpha * l_sc[...] + p.sum(axis=-1, keepdims=True)
    acc_sc[...] = alpha * acc_sc[...] + jnp.einsum(
        "hqk,hkd->hqd", p.astype(v.dtype), v, preferred_element_type=jnp.float32)
    m_sc[...] = m_new

    @pl.when(ki == pl.num_programs(2) - 1)
    def _():
        inv_l = pl.reciprocal(l_sc[...], approx=True)       # EUP, not VALU divide
        o_ref[0] = (acc_sc[...] * inv_l).astype(o_ref.dtype)


# ---------------- kernel 3: out-proj + residual + LN2 + FFN + residual ------
def out_ffn_kernel(x_ref, a_ref, wout_ref, bout_ref, g2_ref, b2_ref,
                   w1_ref, bb1_ref, w2_ref, bb2_ref, o_ref):
    x = x_ref[0].astype(jnp.float32)                        # (bs, D)
    a = a_ref[0]                                            # (heads, bs, dh) bf16

    # Head merge fused into the output projection: sum_h a[h] @ Wout[h].
    # (Batched einsum + major-axis reduce; no transpose/reshape of `a`.)
    t = jnp.einsum("hsd,hde->hse", a, wout_ref[...],
                   preferred_element_type=jnp.float32)      # (heads, bs, D)
    attn = jnp.sum(t, axis=0) + bout_ref[...]               # (bs, D) f32
    x1 = x + attn                                           # residual in f32

    xn2 = _layernorm(x1, g2_ref[...], b2_ref[...]).astype(w1_ref.dtype)
    h1 = jnp.dot(xn2, w1_ref[...], preferred_element_type=jnp.float32) + bb1_ref[...]
    h1 = _gelu_exact(h1)                                    # erf == torch nn.GELU()
    ff = jnp.dot(h1.astype(w2_ref.dtype), w2_ref[...],
                 preferred_element_type=jnp.float32) + bb2_ref[...]

    o_ref[0] = (x1 + ff).astype(o_ref.dtype)                # one lane-dense store


# ---------------- wrapper ----------------------------------------------------
def transformer_block(x, params, heads, *, block_s=None):
    B, S, D = x.shape
    dh = D // heads
    H = params["w1"].shape[1]
    if block_s is None:
        block_s = S if S <= 256 else 256
    assert S % block_s == 0, "sequence length must be a multiple of the seq tile"
    n_s = S // block_s
    scale = 1.0 / math.sqrt(dh)

    cdt = jnp.bfloat16                     # MXU operand dtype; accumulation is f32
    wq = params["wq"].astype(cdt)
    wk = params["wk"].astype(cdt)
    wv = params["wv"].astype(cdt)
    wout = params["wout"].reshape(heads, dh, D).astype(cdt)   # head-major Wout
    w1 = params["w1"].astype(cdt)
    w2 = params["w2"].astype(cdt)

    vec = lambda d: pl.BlockSpec((1, d), lambda b, si: (0, 0))
    mat = lambda r, c: pl.BlockSpec((r, c), lambda b, si: (0, 0))

    # ---- kernel 1: LN1 + QKV -> head-major q/k/v ---------------------------
    qkv_shape = jax.ShapeDtypeStruct((B, heads, S, dh), cdt)
    q, k, v = pl.pallas_call(
        partial(ln_qkv_kernel, heads=heads, scale=scale),
        out_shape=(qkv_shape, qkv_shape, qkv_shape),
        grid=(B, n_s),
        in_specs=[
            pl.BlockSpec((1, block_s, D), lambda b, si: (b, si, 0)),   # x
            vec(D), vec(D),                                            # LN1 g/b
            mat(D, D), mat(D, D), mat(D, D),                           # Wq Wk Wv
        ],
        out_specs=tuple(
            pl.BlockSpec((1, heads, block_s, dh), lambda b, si: (b, 0, si, 0))
            for _ in range(3)),
        compiler_params=pltpu.CompilerParams(
            dimension_semantics=("parallel", "parallel")),
    )(x, params["g1"], params["b1"], wq, wk, wv)

    # ---- kernel 2: flash attention (KV reduction is the last grid axis) ----
    attn = pl.pallas_call(
        flash_attn_kernel,
        out_shape=jax.ShapeDtypeStruct((B, heads, S, dh), cdt),
        grid=(B, n_s, n_s),
        in_specs=[
            pl.BlockSpec((1, heads, block_s, dh), lambda b, qi, ki: (b, 0, qi, 0)),
            pl.BlockSpec((1, heads, block_s, dh), lambda b, qi, ki: (b, 0, ki, 0)),
            pl.BlockSpec((1, heads, block_s, dh), lambda b, qi, ki: (b, 0, ki, 0)),
        ],
        out_specs=pl.BlockSpec((1, heads, block_s, dh),
                               lambda b, qi, ki: (b, 0, qi, 0)),
        scratch_shapes=[
            pltpu.VMEM((heads, block_s, 1), jnp.float32),    # running max
            pltpu.VMEM((heads, block_s, 1), jnp.float32),    # running denom
            pltpu.VMEM((heads, block_s, dh), jnp.float32),   # output accumulator
        ],
        compiler_params=pltpu.CompilerParams(
            dimension_semantics=("parallel", "parallel", "arbitrary")),
    )(q, k, v)

    # ---- kernel 3: out-proj + residual + LN2 + FFN + residual --------------
    y = pl.pallas_call(
        out_ffn_kernel,
        out_shape=jax.ShapeDtypeStruct((B, S, D), x.dtype),
        grid=(B, n_s),
        in_specs=[
            pl.BlockSpec((1, block_s, D), lambda b, si: (b, si, 0)),             # x
            pl.BlockSpec((1, heads, block_s, dh), lambda b, si: (b, 0, si, 0)),  # attn
            pl.BlockSpec((heads, dh, D), lambda b, si: (0, 0, 0)),               # Wout
            vec(D),                                                              # bout
            vec(D), vec(D),                                                      # LN2 g/b
            mat(D, H), vec(H),                                                   # W1, b1
            mat(H, D), vec(D),                                                   # W2, b2
        ],
        out_specs=pl.BlockSpec((1, block_s, D), lambda b, si: (b, si, 0)),
        compiler_params=pltpu.CompilerParams(
            dimension_semantics=("parallel", "parallel")),
    )(x, attn, wout, params["bout"], params["g2"], params["b2"],
      w1, params["bb1"], w2, params["bb2"])
    return y


# ---------------- params (match PyTorch init; stored [in_dim, out_dim]) ------
def _xavier_uniform(key, fan_in, fan_out):
    # torch.nn.init.xavier_uniform_ (gain=1); stored pre-transposed so kernels
    # compute x @ W directly.
    bound = math.sqrt(6.0 / (fan_in + fan_out))
    return jax.random.uniform(key, (fan_in, fan_out), jnp.float32, -bound, bound)


def init_params(key, dim, mlp_mult):
    hidden = dim * mlp_mult
    ks = jax.random.split(key, 4)
    # The reference uses a single Linear(dim, 3*dim, bias=False) for QKV, so
    # xavier fan is (dim, 3*dim); split into q/k/v afterwards.
    wqkv = _xavier_uniform(ks[0], dim, 3 * dim)
    return {
        "g1": jnp.ones((1, dim), jnp.float32),
        "b1": jnp.zeros((1, dim), jnp.float32),
        "wq": wqkv[:, 0 * dim:1 * dim],
        "wk": wqkv[:, 1 * dim:2 * dim],
        "wv": wqkv[:, 2 * dim:3 * dim],
        "wout": _xavier_uniform(ks[1], dim, dim),
        "bout": jnp.zeros((1, dim), jnp.float32),
        "g2": jnp.ones((1, dim), jnp.float32),
        "b2": jnp.zeros((1, dim), jnp.float32),
        "w1": _xavier_uniform(ks[2], dim, hidden),
        "bb1": jnp.zeros((1, hidden), jnp.float32),
        "w2": _xavier_uniform(ks[3], hidden, dim),
        "bb2": jnp.zeros((1, dim), jnp.float32),
    }


# ---------------- pure-JAX reference (for a loose numerical sanity check) ----
def reference_block(x, params, heads):
    D = x.shape[-1]
    dh = D // heads

    def ln(t, g, b):
        mu = jnp.mean(t, -1, keepdims=True)
        var = jnp.mean((t - mu) ** 2, -1, keepdims=True)
        return (t - mu) * jax.lax.rsqrt(var + 1e-5) * g + b

    xn = ln(x, params["g1"], params["b1"])
    q = xn @ params["wq"]
    k = xn @ params["wk"]
    v = xn @ params["wv"]

    def split(t):
        B, S, _ = t.shape
        return t.reshape(B, S, heads, dh).transpose(0, 2, 1, 3)

    q, k, v = split(q), split(k), split(v)
    s = jnp.einsum("bhqd,bhkd->bhqk", q, k) / math.sqrt(dh)
    p = jax.nn.softmax(s, axis=-1)
    o = jnp.einsum("bhqk,bhkd->bhqd", p, v)
    o = o.transpose(0, 2, 1, 3).reshape(x.shape)
    attn = o @ params["wout"] + params["bout"]
    x1 = x + attn
    xn2 = ln(x1, params["g2"], params["b2"])
    h1 = jax.nn.gelu(xn2 @ params["w1"] + params["bb1"], approximate=False)
    ff = h1 @ params["w2"] + params["bb2"]
    return x1 + ff


if __name__ == "__main__":
    # Small shapes; block_s=8 < S so both the sequence tiling and the KV
    # reduction (online-softmax accumulation across grid steps) are exercised.
    B, S, D, heads, mlp_mult = 2, 16, 32, 4, 4

    key = jax.random.PRNGKey(0)
    kx, kp = jax.random.split(key)
    x = jax.random.normal(kx, (B, S, D), jnp.float32)
    params = init_params(kp, D, mlp_mult)

    y = transformer_block(x, params, heads, block_s=8)
    jax.block_until_ready(y)
    assert y.shape == (B, S, D)
    assert bool(jnp.all(jnp.isfinite(y)))

    # Loose tolerance: kernel runs matmuls with bf16 operands / f32 accumulate.
    y_ref = reference_block(x, params, heads)
    max_err = float(jnp.max(jnp.abs(y - y_ref)))
    assert max_err < 0.2, max_err

    print("KERNEL_OK")
</pallas_src>

<mosaic_0001>
module attributes {stable_mosaic.version = 11 : i64} {
  func.func @ln_qkv_kernel(%arg0: i32, %arg1: i32, %arg2: memref<1x8x32xf32, #tpu.memory_space<vmem>>, %arg3: memref<1x32xf32, #tpu.memory_space<vmem>>, %arg4: memref<1x32xf32, #tpu.memory_space<vmem>>, %arg5: memref<32x32xbf16, #tpu.memory_space<vmem>>, %arg6: memref<32x32xbf16, #tpu.memory_space<vmem>>, %arg7: memref<32x32xbf16, #tpu.memory_space<vmem>>, %arg8: memref<1x4x8x8xbf16, #tpu.memory_space<vmem>>, %arg9: memref<1x4x8x8xbf16, #tpu.memory_space<vmem>>, %arg10: memref<1x4x8x8xbf16, #tpu.memory_space<vmem>>) attributes {dimension_semantics = [#tpu.dimension_semantics<parallel>, #tpu.dimension_semantics<parallel>], iteration_bounds = array<i64: 2, 2>, scalar_prefetch = 0 : i64, scratch_operands = 0 : i64, tpu.core_type = #tpu.core_type<tc>, window_params = [{transform_indices = @transform_0, window_bounds = array<i64: 1, 8, 32>}, {pipeline_mode = #tpu.pipeline_mode<synchronous>, transform_indices = @transform_1, window_bounds = array<i64: 1, 32>}, {pipeline_mode = #tpu.pipeline_mode<synchronous>, transform_indices = @transform_2, window_bounds = array<i64: 1, 32>}, {pipeline_mode = #tpu.pipeline_mode<synchronous>, transform_indices = @transform_3, window_bounds = array<i64: 32, 32>}, {pipeline_mode = #tpu.pipeline_mode<synchronous>, transform_indices = @transform_4, window_bounds = array<i64: 32, 32>}, {pipeline_mode = #tpu.pipeline_mode<synchronous>, transform_indices = @transform_5, window_bounds = array<i64: 32, 32>}, {transform_indices = @transform_6, window_bounds = array<i64: 1, 4, 8, 8>}, {transform_indices = @transform_7, window_bounds = array<i64: 1, 4, 8, 8>}, {transform_indices = @transform_8, window_bounds = array<i64: 1, 4, 8, 8>}]} {
    %c0 = arith.constant 0 : index
    %c0_0 = arith.constant 0 : index
    %c0_1 = arith.constant 0 : index
    %0 = vector.load %arg2[%c0, %c0_0, %c0_1] : memref<1x8x32xf32, #tpu.memory_space<vmem>>, vector<1x8x32xf32>
    %1 = vector.shape_cast %0 : vector<1x8x32xf32> to vector<8x32xf32>
    %c0_2 = arith.constant 0 : index
    %c0_3 = arith.constant 0 : index
    %2 = vector.load %arg3[%c0_2, %c0_3] : memref<1x32xf32, #tpu.memory_space<vmem>>, vector<1x32xf32>
    %c0_4 = arith.constant 0 : index
    %c0_5 = arith.constant 0 : index
    %3 = vector.load %arg4[%c0_4, %c0_5] : memref<1x32xf32, #tpu.memory_space<vmem>>, vector<1x32xf32>
    %cst = arith.constant dense<0.000000e+00> : vector<8xf32>
    %4 = vector.multi_reduction <add>, %1, %cst [1] : vector<8x32xf32> to vector<8xf32>
    %5 = vector.shape_cast %4 : vector<8xf32> to vector<8x1xf32>
    %cst_6 = arith.constant 3.200000e+01 : f32
    %6 = vector.broadcast %cst_6 : f32 to vector<8x1xf32>
    %7 = arith.divf %5, %6 : vector<8x1xf32>
    %8 = vector.broadcast %7 : vector<8x1xf32> to vector<8x32xf32>
    %9 = arith.subf %1, %8 : vector<8x32xf32>
    %10 = arith.mulf %9, %9 : vector<8x32xf32>
    %cst_7 = arith.constant dense<0.000000e+00> : vector<8xf32>
    %11 = vector.multi_reduction <add>, %10, %cst_7 [1] : vector<8x32xf32> to vector<8xf32>
    %12 = vector.shape_cast %11 : vector<8xf32> to vector<8x1xf32>
    %cst_8 = arith.constant 3.200000e+01 : f32
    %13 = vector.broadcast %cst_8 : f32 to vector<8x1xf32>
    %14 = arith.divf %12, %13 : vector<8x1xf32>
    %15 = vector.broadcast %7 : vector<8x1xf32> to vector<8x32xf32>
    %16 = arith.subf %1, %15 : vector<8x32xf32>
    %cst_9 = arith.constant 9.99999974E-6 : f32
    %17 = vector.broadcast %cst_9 : f32 to vector<8x1xf32>
    %18 = arith.addf %14, %17 : vector<8x1xf32>
    %19 = math.rsqrt %18 : vector<8x1xf32>
    %20 = vector.broadcast %19 : vector<8x1xf32> to vector<8x32xf32>
    %21 = arith.mulf %16, %20 : vector<8x32xf32>
    %22 = vector.broadcast %2 : vector<1x32xf32> to vector<8x32xf32>
    %23 = arith.mulf %21, %22 : vector<8x32xf32>
    %24 = vector.broadcast %3 : vector<1x32xf32> to vector<8x32xf32>
    %25 = arith.addf %23, %24 : vector<8x32xf32>
    %26 = arith.truncf %25 : vector<8x32xf32> to vector<8x32xbf16>
    %c0_10 = arith.constant 0 : index
    %c0_11 = arith.constant 0 : index
    %27 = vector.load %arg5[%c0_10, %c0_11] : memref<32x32xbf16, #tpu.memory_space<vmem>>, vector<32x32xbf16>
    %cst_12 = arith.constant dense<0.000000e+00> : vector<8x32xf32>
    %28 = tpu.matmul %26, %27, %cst_12 {dimension_numbers = #tpu.dot_dimension_numbers<[1], [0], [0], [1], [0, 0, 1, 1], [], []>} : vector<8x32xbf16>, vector<32x32xbf16>, vector<8x32xf32> -> vector<8x32xf32>
    %cst_13 = arith.constant 0.353553385 : f32
    %29 = vector.broadcast %cst_13 : f32 to vector<8x32xf32>
    %30 = arith.mulf %28, %29 : vector<8x32xf32>
    %c0_14 = arith.constant 0 : index
    %c0_15 = arith.constant 0 : index
    %31 = vector.load %arg6[%c0_14, %c0_15] : memref<32x32xbf16, #tpu.memory_space<vmem>>, vector<32x32xbf16>
    %cst_16 = arith.constant dense<0.000000e+00> : vector<8x32xf32>
    %32 = tpu.matmul %26, %31, %cst_16 {dimension_numbers = #tpu.dot_dimension_numbers<[1], [0], [0], [1], [0, 0, 1, 1], [], []>} : vector<8x32xbf16>, vector<32x32xbf16>, vector<8x32xf32> -> vector<8x32xf32>
    %c0_17 = arith.constant 0 : index
    %c0_18 = arith.constant 0 : index
    %33 = vector.load %arg7[%c0_17, %c0_18] : memref<32x32xbf16, #tpu.memory_space<vmem>>, vector<32x32xbf16>
    %cst_19 = arith.constant dense<0.000000e+00> : vector<8x32xf32>
    %34 = tpu.matmul %26, %33, %cst_19 {dimension_numbers = #tpu.dot_dimension_numbers<[1], [0], [0], [1], [0, 0, 1, 1], [], []>} : vector<8x32xbf16>, vector<32x32xbf16>, vector<8x32xf32> -> vector<8x32xf32>
    %35 = arith.truncf %30 : vector<8x32xf32> to vector<8x32xbf16>
    %36 = arith.truncf %32 : vector<8x32xf32> to vector<8x32xbf16>
    %37 = arith.truncf %34 : vector<8x32xf32> to vector<8x32xbf16>
    %38 = vector.extract_strided_slice %35 {offsets = [0, 0], sizes = [8, 8], strides = [1, 1]} : vector<8x32xbf16> to vector<8x8xbf16>
    %c0_20 = arith.constant 0 : index
    %c0_21 = arith.constant 0 : index
    %c0_22 = arith.constant 0 : index
    %c0_23 = arith.constant 0 : index
    %39 = vector.load %arg8[%c0_20, %c0_21, %c0_22, %c0_23] : memref<1x4x8x8xbf16, #tpu.memory_space<vmem>>, vector<1x1x8x8xbf16>
    %40 = vector.shape_cast %39 : vector<1x1x8x8xbf16> to vector<8x8xbf16>
    %41 = vector.shape_cast %38 : vector<8x8xbf16> to vector<1x1x8x8xbf16>
    tpu.vector_store %arg8[%c0_20, %c0_21, %c0_22, %c0_23], %41 {strides = array<i32>} : memref<1x4x8x8xbf16, #tpu.memory_space<vmem>>, vector<1x1x8x8xbf16>,
    %42 = vector.extract_strided_slice %36 {offsets = [0, 0], sizes = [8, 8], strides = [1, 1]} : vector<8x32xbf16> to vector<8x8xbf16>
    %c0_24 = arith.constant 0 : index
    %c0_25 = arith.constant 0 : index
    %c0_26 = arith.constant 0 : index
    %c0_27 = arith.constant 0 : index
    %43 = vector.load %arg9[%c0_24, %c0_25, %c0_26, %c0_27] : memref<1x4x8x8xbf16, #tpu.memory_space<vmem>>, vector<1x1x8x8xbf16>
    %44 = vector.shape_cast %43 : vector<1x1x8x8xbf16> to vector<8x8xbf16>
    %45 = vector.shape_cast %42 : vector<8x8xbf16> to vector<1x1x8x8xbf16>
    tpu.vector_store %arg9[%c0_24, %c0_25, %c0_26, %c0_27], %45 {strides = array<i32>} : memref<1x4x8x8xbf16, #tpu.memory_space<vmem>>, vector<1x1x8x8xbf16>,
    %46 = vector.extract_strided_slice %37 {offsets = [0, 0], sizes = [8, 8], strides = [1, 1]} : vector<8x32xbf16> to vector<8x8xbf16>
    %c0_28 = arith.constant 0 : index
    %c0_29 = arith.constant 0 : index
    %c0_30 = arith.constant 0 : index
    %c0_31 = arith.constant 0 : index
    %47 = vector.load %arg10[%c0_28, %c0_29, %c0_30, %c0_31] : memref<1x4x8x8xbf16, #tpu.memory_space<vmem>>, vector<1x1x8x8xbf16>
    %48 = vector.shape_cast %47 : vector<1x1x8x8xbf16> to vector<8x8xbf16>
    %49 = vector.shape_cast %46 : vector<8x8xbf16> to vector<1x1x8x8xbf16>
    tpu.vector_store %arg10[%c0_28, %c0_29, %c0_30, %c0_31], %49 {strides = array<i32>} : memref<1x4x8x8xbf16, #tpu.memory_space<vmem>>, vector<1x1x8x8xbf16>,
    %50 = vector.extract_strided_slice %35 {offsets = [0, 8], sizes = [8, 8], strides = [1, 1]} : vector<8x32xbf16> to vector<8x8xbf16>
    %c0_32 = arith.constant 0 : index
    %c1 = arith.constant 1 : index
    %c0_33 = arith.constant 0 : index
    %c0_34 = arith.constant 0 : index
    %51 = vector.load %arg8[%c0_32, %c1, %c0_33, %c0_34] : memref<1x4x8x8xbf16, #tpu.memory_space<vmem>>, vector<1x1x8x8xbf16>
    %52 = vector.shape_cast %51 : vector<1x1x8x8xbf16> to vector<8x8xbf16>
    %53 = vector.shape_cast %50 : vector<8x8xbf16> to vector<1x1x8x8xbf16>
    tpu.vector_store %arg8[%c0_32, %c1, %c0_33, %c0_34], %53 {strides = array<i32>} : memref<1x4x8x8xbf16, #tpu.memory_space<vmem>>, vector<1x1x8x8xbf16>,
    %54 = vector.extract_strided_slice %36 {offsets = [0, 8], sizes = [8, 8], strides = [1, 1]} : vector<8x32xbf16> to vector<8x8xbf16>
    %c0_35 = arith.constant 0 : index
    %c1_36 = arith.constant 1 : index
    %c0_37 = arith.constant 0 : index
    %c0_38 = arith.constant 0 : index
    %55 = vector.load %arg9[%c0_35, %c1_36, %c0_37, %c0_38] : memref<1x4x8x8xbf16, #tpu.memory_space<vmem>>, vector<1x1x8x8xbf16>
    %56 = vector.shape_cast %55 : vector<1x1x8x8xbf16> to vector<8x8xbf16>
    %57 = vector.shape_cast %54 : vector<8x8xbf16> to vector<1x1x8x8xbf16>
    tpu.vector_store %arg9[%c0_35, %c1_36, %c0_37, %c0_38], %57 {strides = array<i32>} : memref<1x4x8x8xbf16, #tpu.memory_space<vmem>>, vector<1x1x8x8xbf16>,
    %58 = vector.extract_strided_slice %37 {offsets = [0, 8], sizes = [8, 8], strides = [1, 1]} : vector<8x32xbf16> to vector<8x8xbf16>
    %c0_39 = arith.constant 0 : index
    %c1_40 = arith.constant 1 : index
    %c0_41 = arith.constant 0 : index
    %c0_42 = arith.constant 0 : index
    %59 = vector.load %arg10[%c0_39, %c1_40, %c0_41, %c0_42] : memref<1x4x8x8xbf16, #tpu.memory_space<vmem>>, vector<1x1x8x8xbf16>
    %60 = vector.shape_cast %59 : vector<1x1x8x8xbf16> to vector<8x8xbf16>
    %61 = vector.shape_cast %58 : vector<8x8xbf16> to vector<1x1x8x8xbf16>
    tpu.vector_store %arg10[%c0_39, %c1_40, %c0_41, %c0_42], %61 {strides = array<i32>} : memref<1x4x8x8xbf16, #tpu.memory_space<vmem>>, vector<1x1x8x8xbf16>,
    %62 = vector.extract_strided_slice %35 {offsets = [0, 16], sizes = [8, 8], strides = [1, 1]} : vector<8x32xbf16> to vector<8x8xbf16>
    %c0_43 = arith.constant 0 : index
    %c2 = arith.constant 2 : index
    %c0_44 = arith.constant 0 : index
    %c0_45 = arith.constant 0 : index
    %63 = vector.load %arg8[%c0_43, %c2, %c0_44, %c0_45] : memref<1x4x8x8xbf16, #tpu.memory_space<vmem>>, vector<1x1x8x8xbf16>
    %64 = vector.shape_cast %63 : vector<1x1x8x8xbf16> to vector<8x8xbf16>
    %65 = vector.shape_cast %62 : vector<8x8xbf16> to vector<1x1x8x8xbf16>
    tpu.vector_store %arg8[%c0_43, %c2, %c0_44, %c0_45], %65 {strides = array<i32>} : memref<1x4x8x8xbf16, #tpu.memory_space<vmem>>, vector<1x1x8x8xbf16>,
    %66 = vector.extract_strided_slice %36 {offsets = [0, 16], sizes = [8, 8], strides = [1, 1]} : vector<8x32xbf16> to vector<8x8xbf16>
    %c0_46 = arith.constant 0 : index
    %c2_47 = arith.constant 2 : index
    %c0_48 = arith.constant 0 : index
    %c0_49 = arith.constant 0 : index
    %67 = vector.load %arg9[%c0_46, %c2_47, %c0_48, %c0_49] : memref<1x4x8x8xbf16, #tpu.memory_space<vmem>>, vector<1x1x8x8xbf16>
    %68 = vector.shape_cast %67 : vector<1x1x8x8xbf16> to vector<8x8xbf16>
    %69 = vector.shape_cast %66 : vector<8x8xbf16> to vector<1x1x8x8xbf16>
    tpu.vector_store %arg9[%c0_46, %c2_47, %c0_48, %c0_49], %69 {strides = array<i32>} : memref<1x4x8x8xbf16, #tpu.memory_space<vmem>>, vector<1x1x8x8xbf16>,
    %70 = vector.extract_strided_slice %37 {offsets = [0, 16], sizes = [8, 8], strides = [1, 1]} : vector<8x32xbf16> to vector<8x8xbf16>
    %c0_50 = arith.constant 0 : index
    %c2_51 = arith.constant 2 : index
    %c0_52 = arith.constant 0 : index
    %c0_53 = arith.constant 0 : index
    %71 = vector.load %arg10[%c0_50, %c2_51, %c0_52, %c0_53] : memref<1x4x8x8xbf16, #tpu.memory_space<vmem>>, vector<1x1x8x8xbf16>
    %72 = vector.shape_cast %71 : vector<1x1x8x8xbf16> to vector<8x8xbf16>
    %73 = vector.shape_cast %70 : vector<8x8xbf16> to vector<1x1x8x8xbf16>
    tpu.vector_store %arg10[%c0_50, %c2_51, %c0_52, %c0_53], %73 {strides = array<i32>} : memref<1x4x8x8xbf16, #tpu.memory_space<vmem>>, vector<1x1x8x8xbf16>,
    %74 = vector.extract_strided_slice %35 {offsets = [0, 24], sizes = [8, 8], strides = [1, 1]} : vector<8x32xbf16> to vector<8x8xbf16>
    %c0_54 = arith.constant 0 : index
    %c3 = arith.constant 3 : index
    %c0_55 = arith.constant 0 : index
    %c0_56 = arith.constant 0 : index
    %75 = vector.load %arg8[%c0_54, %c3, %c0_55, %c0_56] : memref<1x4x8x8xbf16, #tpu.memory_space<vmem>>, vector<1x1x8x8xbf16>
    %76 = vector.shape_cast %75 : vector<1x1x8x8xbf16> to vector<8x8xbf16>
    %77 = vector.shape_cast %74 : vector<8x8xbf16> to vector<1x1x8x8xbf16>
    tpu.vector_store %arg8[%c0_54, %c3, %c0_55, %c0_56], %77 {strides = array<i32>} : memref<1x4x8x8xbf16, #tpu.memory_space<vmem>>, vector<1x1x8x8xbf16>,
    %78 = vector.extract_strided_slice %36 {offsets = [0, 24], sizes = [8, 8], strides = [1, 1]} : vector<8x32xbf16> to vector<8x8xbf16>
    %c0_57 = arith.constant 0 : index
    %c3_58 = arith.constant 3 : index
    %c0_59 = arith.constant 0 : index
    %c0_60 = arith.constant 0 : index
    %79 = vector.load %arg9[%c0_57, %c3_58, %c0_59, %c0_60] : memref<1x4x8x8xbf16, #tpu.memory_space<vmem>>, vector<1x1x8x8xbf16>
    %80 = vector.shape_cast %79 : vector<1x1x8x8xbf16> to vector<8x8xbf16>
    %81 = vector.shape_cast %78 : vector<8x8xbf16> to vector<1x1x8x8xbf16>
    tpu.vector_store %arg9[%c0_57, %c3_58, %c0_59, %c0_60], %81 {strides = array<i32>} : memref<1x4x8x8xbf16, #tpu.memory_space<vmem>>, vector<1x1x8x8xbf16>,
    %82 = vector.extract_strided_slice %37 {offsets = [0, 24], sizes = [8, 8], strides = [1, 1]} : vector<8x32xbf16> to vector<8x8xbf16>
    %c0_61 = arith.constant 0 : index
    %c3_62 = arith.constant 3 : index
    %c0_63 = arith.constant 0 : index
    %c0_64 = arith.constant 0 : index
    %83 = vector.load %arg10[%c0_61, %c3_62, %c0_63, %c0_64] : memref<1x4x8x8xbf16, #tpu.memory_space<vmem>>, vector<1x1x8x8xbf16>
    %84 = vector.shape_cast %83 : vector<1x1x8x8xbf16> to vector<8x8xbf16>
    %85 = vector.shape_cast %82 : vector<8x8xbf16> to vector<1x1x8x8xbf16>
    tpu.vector_store %arg10[%c0_61, %c3_62, %c0_63, %c0_64], %85 {strides = array<i32>} : memref<1x4x8x8xbf16, #tpu.memory_space<vmem>>, vector<1x1x8x8xbf16>,
    return
  }
  func.func @transform_0(%arg0: i32, %arg1: i32) -> (i32, i32, i32) {
    %c0_i32 = arith.constant 0 : i32
    %c0_i32_0 = arith.constant 0 : i32
    return %arg0, %arg1, %c0_i32 : i32, i32, i32
  }
  func.func @transform_1(%arg0: i32, %arg1: i32) -> (i32, i32) {
    %c0_i32 = arith.constant 0 : i32
    %c0_i32_0 = arith.constant 0 : i32
    %c0_i32_1 = arith.constant 0 : i32
    return %c0_i32, %c0_i32_0 : i32, i32
  }
  func.func @transform_2(%arg0: i32, %arg1: i32) -> (i32, i32) {
    %c0_i32 = arith.constant 0 : i32
    %c0_i32_0 = arith.constant 0 : i32
    %c0_i32_1 = arith.constant 0 : i32
    return %c0_i32, %c0_i32_0 : i32, i32
  }
  func.func @transform_3(%arg0: i32, %arg1: i32) -> (i32, i32) {
    %c0_i32 = arith.constant 0 : i32
    %c0_i32_0 = arith.constant 0 : i32
    %c0_i32_1 = arith.constant 0 : i32
    return %c0_i32, %c0_i32_0 : i32, i32
  }
  func.func @transform_4(%arg0: i32, %arg1: i32) -> (i32, i32) {
    %c0_i32 = arith.constant 0 : i32
    %c0_i32_0 = arith.constant 0 : i32
    %c0_i32_1 = arith.constant 0 : i32
    return %c0_i32, %c0_i32_0 : i32, i32
  }
  func.func @transform_5(%arg0: i32, %arg1: i32) -> (i32, i32) {
    %c0_i32 = arith.constant 0 : i32
    %c0_i32_0 = arith.constant 0 : i32
    %c0_i32_1 = arith.constant 0 : i32
    return %c0_i32, %c0_i32_0 : i32, i32
  }
  func.func @transform_6(%arg0: i32, %arg1: i32) -> (i32, i32, i32, i32) {
    %c0_i32 = arith.constant 0 : i32
    %c0_i32_0 = arith.constant 0 : i32
    %c0_i32_1 = arith.constant 0 : i32
    return %arg0, %c0_i32, %arg1, %c0_i32_0 : i32, i32, i32, i32
  }
  func.func @transform_7(%arg0: i32, %arg1: i32) -> (i32, i32, i32, i32) {
    %c0_i32 = arith.constant 0 : i32
    %c0_i32_0 = arith.constant 0 : i32
    %c0_i32_1 = arith.constant 0 : i32
    return %arg0, %c0_i32, %arg1, %c0_i32_0 : i32, i32, i32, i32
  }
  func.func @transform_8(%arg0: i32, %arg1: i32) -> (i32, i32, i32, i32) {
    %c0_i32 = arith.constant 0 : i32
    %c0_i32_0 = arith.constant 0 : i32
    %c0_i32_1 = arith.constant 0 : i32
    return %arg0, %c0_i32, %arg1, %c0_i32_0 : i32, i32, i32, i32
  }
}

</mosaic_0001>

<llo_original>
// kernel: tpu_custom_call.1
$region0: #{tpu_custom_call.1}
  #allocation0 [shape = 'u32[]', space=smem, size = 0x4, offset = 0x4, fixed_abs, tag = 'smem constant byte address 0x4 - core index']
  #allocation1 [shape = 'u32[144,128]{1,0:T(1,128)}', space=vmem, size = 0x12000, scoped, tag = 'internal scratch']
  %s0 = inlined_call_operand.hbm [shape: f32[2,16,32], index: 0, kind: input, shape index: {}]
  %s1 = inlined_call_operand.vmem [shape: f32[1,32], index: 1, kind: input, shape index: {}]
  %s2 = inlined_call_operand.vmem [shape: f32[1,32], index: 2, kind: input, shape index: {}]
  %s3 = inlined_call_operand.hbm [shape: bf16[32,32], index: 3, kind: input, shape index: {}]
  %s4 = inlined_call_operand.hbm [shape: bf16[32,32], index: 4, kind: input, shape index: {}]
  %s5 = inlined_call_operand.vmem [shape: bf16[32,32], index: 5, kind: input, shape index: {}]
  %s6 = inlined_call_operand.vmem [shape: bf16[2,4,16,8], index: 6, kind: output, shape index: {0}]
  %s7 = inlined_call_operand.vmem [shape: bf16[2,4,16,8], index: 7, kind: output, shape index: {1}]
  %s8 = inlined_call_operand.vmem [shape: bf16[2,4,16,8], index: 8, kind: output, shape index: {2}]
  %9 = xla_tuple %s6, %s7, %s8
  %s10 = sld [smem:[#allocation0]]
  $region196: #{tpu_custom_call.1} parent=0
    _
  %s12 = ssub.s32 1, %s10
  %s13 = scalar_select 0, %s12, %s10
  $region1: #{tpu_custom_call.1} parent=0
    #allocation2 [shape = 'u8[8192]{0}', space=vmem, size = 0x2000, scoped, tag = 'input window, operand 0']
    #allocation3 [shape = 's32[2]{0}', space=sflag, size = 0x8, scoped, tag = 'scoped memory for tpu_custom_call.1']
    #allocation4 [shape = 'u8[8192]{0}', space=vmem, size = 0x2000, scoped, tag = 'input window, operand 3, single buffered']
    #allocation5 [shape = 's32[1]{0}', space=sflag, size = 0x4, scoped, tag = 'scoped memory for tpu_custom_call.1']
    #allocation6 [shape = 'u8[8192]{0}', space=vmem, size = 0x2000, scoped, tag = 'input window, operand 4, single buffered']
    #allocation7 [shape = 'u8[16384]{0}', space=vmem, size = 0x4000, scoped, tag = 'output window, operand 0']
    #allocation8 [shape = 'u8[16384]{0}', space=vmem, size = 0x4000, scoped, tag = 'output window, operand 1']
    #allocation9 [shape = 'u8[16384]{0}', space=vmem, size = 0x4000, scoped, tag = 'output window, operand 2']
    %14 = vsyncpa [#allocation3], 0
    %s15 = scalar_lea.sflag [#allocation3], 1
    %16 = vsyncpa %s15, 0
    %17 = vsyncpa [#allocation5], 0
    loop: start=0, step=1, limit=6
    $region2: #{tpu_custom_call.1} parent=1 // loop_pre_header
      _
    $region3: #{tpu_custom_call.1} parent=1 // loop_header
      %s19 = sphi 0, %s23
      %p20 = scmp.ge.s32.totalorder %s19, 6
      %s26 = sphi 0, %s38
      %s27 = sphi 0, %s34
      %s28 = sphi 0, %s26
      %s29 = sphi 0, %s27
      %s30 = sphi 0, %s28
      %s31 = sphi 0, %s29
      %s43 = sphi 0, %s45
      %s46 = sphi 0, %s43
      %s47 = sphi 0, %s46
      %s63 = sphi 0, %s47
      %s67 = sphi 0, %s67
      %s69 = sphi 0, %s67
      %s70 = sphi 0, %s69
      %s84 = sphi 0, %s70
      %s88 = sphi 0, %s88
      %s90 = sphi 0, %s88
      %s91 = sphi 0, %s90
      %s105 = sphi 0, %s91
      %s109 = sphi 0, %s109
      %s111 = sphi 0, %s109
      %s112 = sphi 0, %s111
      %s126 = sphi 0, %s112
      %s130 = sphi 0, %s130
      %s132 = sphi 0, %s130
      %s133 = sphi 0, %s132
      %s147 = sphi 0, %s133
      %s151 = sphi 0, %s151
      %s153 = sphi 0, %s151
      %s154 = sphi 0, %s153
      %s168 = sphi 0, %s154
      %s176 = sphi 0, %s178
      %s179 = sphi 0, %s176
      %s180 = sphi 0, %s179
      %s196 = sphi 0, %s180
      %s204 = sphi 0, %s206
      %s207 = sphi 0, %s204
      %s208 = sphi 0, %s207
      %s224 = sphi 0, %s208
      %s232 = sphi 0, %s234
      %s235 = sphi 0, %s232
      %s236 = sphi 0, %s235
      %s252 = sphi 0, %s236
    $region4: #{tpu_custom_call.1} parent=1 // loop_header_branch
      %22 = sbr.rel (%p20) target = $region8
    $region5: #{tpu_custom_call.1} parent=1 // loop_body
      %s24 = ssub.s32 %s19, 1
      %s25 = ssub.s32 %s19, 2
      %s32 = sadd.s32 1, %s27
      %p33 = scmp.ge.s32.totalorder %s32, 2
      %s34 = scalar_select %p33, 0, %s32
      %s35 = sadd.s32 1, %s26
      %s36 = scalar_select %p33, %s35, %s26
      %p37 = scmp.ge.s32.totalorder %s36, 2
      %s38 = scalar_select %p37, 0, %s36
      %s39 = ssub.s32 %s26, %s38
      %s40 = ssub.s32 %s27, %s34
      %s41 = sor.u32 %s39, %s40
      %p42 = scmp.eq.s32.totalorder %s41, 0
      %s44 = sadd.s32 %s43, 1
      %s45 = scalar_select %p42, %s43, %s44
      %p48 = pneg %p42
      %p49 = scmp.eq.s32.totalorder %s19, 3
      %p50 = por %p48, %p49
      %p51 = scmp.ne.s32.totalorder %s43, %s46
      %p52 = scmp.eq.s32.totalorder %s19, 0
      %p53 = por %p51, %p52
      %p54 = scmp.ne.s32.totalorder %s43, %s46
      %p55 = scmp.eq.s32.totalorder %s24, 3
      %p56 = por %p54, %p55
      %p57 = scmp.ne.s32.totalorder %s46, %s47
      %p58 = scmp.eq.s32.totalorder %s24, 0
      %p59 = por %p57, %p58
      %p60 = scmp.ne.s32.totalorder %s46, %s47
      %p61 = scmp.eq.s32.totalorder %s25, 3
      %p62 = por %p60, %p61
      %p64 = scmp.ne.s32.totalorder %s47, %s63
      %p65 = scmp.eq.s32.totalorder %s25, 0
      %p66 = por %p64, %p65
      %s68 = sadd.s32 %s67, 1
      %p71 = scmp.eq.s32.totalorder %s19, 3
      %p72 = scmp.ne.s32.totalorder %s67, %s69
      %p73 = scmp.eq.s32.totalorder %s19, 0
      %p74 = por %p72, %p73
      %p75 = scmp.ne.s32.totalorder %s67, %s69
      %p76 = scmp.eq.s32.totalorder %s24, 3
      %p77 = por %p75, %p76
      %p78 = scmp.ne.s32.totalorder %s69, %s70
      %p79 = scmp.eq.s32.totalorder %s24, 0
      %p80 = por %p78, %p79
      %p81 = scmp.ne.s32.totalorder %s69, %s70
      %p82 = scmp.eq.s32.totalorder %s25, 3
      %p83 = por %p81, %p82
      %p85 = scmp.ne.s32.totalorder %s70, %s84
      %p86 = scmp.eq.s32.totalorder %s25, 0
      %p87 = por %p85, %p86
      %s89 = sadd.s32 %s88, 1
      %p92 = scmp.eq.s32.totalorder %s19, 3
      %p93 = scmp.ne.s32.totalorder %s88, %s90
      %p94 = scmp.eq.s32.totalorder %s19, 0
      %p95 = por %p93, %p94
      %p96 = scmp.ne.s32.totalorder %s88, %s90
      %p97 = scmp.eq.s32.totalorder %s24, 3
      %p98 = por %p96, %p97
      %p99 = scmp.ne.s32.totalorder %s90, %s91
      %p100 = scmp.eq.s32.totalorder %s24, 0
      %p101 = por %p99, %p100
      %p102 = scmp.ne.s32.totalorder %s90, %s91
      %p103 = scmp.eq.s32.totalorder %s25, 3
      %p104 = por %p102, %p103
      %p106 = scmp.ne.s32.totalorder %s91, %s105
      %p107 = scmp.eq.s32.totalorder %s25, 0
      %p108 = por %p106, %p107
      %s110 = sadd.s32 %s109, 1
      %p113 = scmp.eq.s32.totalorder %s19, 3
      %p114 = scmp.ne.s32.totalorder %s109, %s111
      %p115 = scmp.eq.s32.totalorder %s19, 0
      %p116 = por %p114, %p115
      %p117 = scmp.ne.s32.totalorder %s109, %s111
      %p118 = scmp.eq.s32.totalorder %s24, 3
      %p119 = por %p117, %p118
      %p120 = scmp.ne.s32.totalorder %s111, %s112
      %p121 = scmp.eq.s32.totalorder %s24, 0
      %p122 = por %p120, %p121
      %p123 = scmp.ne.s32.totalorder %s111, %s112
      %p124 = scmp.eq.s32.totalorder %s25, 3
      %p125 = por %p123, %p124
      %p127 = scmp.ne.s32.totalorder %s112, %s126
      %p128 = scmp.eq.s32.totalorder %s25, 0
      %p129 = por %p127, %p128
      %s131 = sadd.s32 %s130, 1
      %p134 = scmp.eq.s32.totalorder %s19, 3
      %p135 = scmp.ne.s32.totalorder %s130, %s132
      %p136 = scmp.eq.s32.totalorder %s19, 0
      %p137 = por %p135, %p136
      %p138 = scmp.ne.s32.totalorder %s130, %s132
      %p139 = scmp.eq.s32.totalorder %s24, 3
      %p140 = por %p138, %p139
      %p141 = scmp.ne.s32.totalorder %s132, %s133
      %p142 = scmp.eq.s32.totalorder %s24, 0
      %p143 = por %p141, %p142
      %p144 = scmp.ne.s32.totalorder %s132, %s133
      %p145 = scmp.eq.s32.totalorder %s25, 3
      %p146 = por %p144, %p145
      %p148 = scmp.ne.s32.totalorder %s133, %s147
      %p149 = scmp.eq.s32.totalorder %s25, 0
      %p150 = por %p148, %p149
      %s152 = sadd.s32 %s151, 1
      %p155 = scmp.eq.s32.totalorder %s19, 3
      %p156 = scmp.ne.s32.totalorder %s151, %s153
      %p157 = scmp.eq.s32.totalorder %s19, 0
      %p158 = por %p156, %p157
      %p159 = scmp.ne.s32.totalorder %s151, %s153
      %p160 = scmp.eq.s32.totalorder %s24, 3
      %p161 = por %p159, %p160
      %p162 = scmp.ne.s32.totalorder %s153, %s154
      %p163 = scmp.eq.s32.totalorder %s24, 0
      %p164 = por %p162, %p163
      %p165 = scmp.ne.s32.totalorder %s153, %s154
      %p166 = scmp.eq.s32.totalorder %s25, 3
      %p167 = por %p165, %p166
      %p169 = scmp.ne.s32.totalorder %s154, %s168
      %p170 = scmp.eq.s32.totalorder %s25, 0
      %p171 = por %p169, %p170
      %s172 = ssub.s32 %s26, %s38
      %s173 = ssub.s32 %s27, %s34
      %s174 = sor.u32 %s172, %s173
      %p175 = scmp.eq.s32.totalorder %s174, 0
      %s177 = sadd.s32 %s176, 1
      %s178 = scalar_select %p175, %s176, %s177
      %p181 = pneg %p175
      %p182 = scmp.eq.s32.totalorder %s19, 3
      %p183 = por %p181, %p182
      %p184 = scmp.ne.s32.totalorder %s176, %s179
      %p185 = scmp.eq.s32.totalorder %s19, 0
      %p186 = por %p184, %p185
      %p187 = scmp.ne.s32.totalorder %s176, %s179
      %p188 = scmp.eq.s32.totalorder %s24, 3
      %p189 = por %p187, %p188
      %p190 = scmp.ne.s32.totalorder %s179, %s180
      %p191 = scmp.eq.s32.totalorder %s24, 0
      %p192 = por %p190, %p191
      %p193 = scmp.ne.s32.totalorder %s179, %s180
      %p194 = scmp.eq.s32.totalorder %s25, 3
      %p195 = por %p193, %p194
      %p197 = scmp.ne.s32.totalorder %s180, %s196
      %p198 = scmp.eq.s32.totalorder %s25, 0
      %p199 = por %p197, %p198
      %s200 = ssub.s32 %s26, %s38
      %s201 = ssub.s32 %s27, %s34
      %s202 = sor.u32 %s200, %s201
      %p203 = scmp.eq.s32.totalorder %s202, 0
      %s205 = sadd.s32 %s204, 1
      %s206 = scalar_select %p203, %s204, %s205
      %p209 = pneg %p203
      %p210 = scmp.eq.s32.totalorder %s19, 3
      %p211 = por %p209, %p210
      %p212 = scmp.ne.s32.totalorder %s204, %s207
      %p213 = scmp.eq.s32.totalorder %s19, 0
      %p214 = por %p212, %p213
      %p215 = scmp.ne.s32.totalorder %s204, %s207
      %p216 = scmp.eq.s32.totalorder %s24, 3
      %p217 = por %p215, %p216
      %p218 = scmp.ne.s32.totalorder %s207, %s208
      %p219 = scmp.eq.s32.totalorder %s24, 0
      %p220 = por %p218, %p219
      %p221 = scmp.ne.s32.totalorder %s207, %s208
      %p222 = scmp.eq.s32.totalorder %s25, 3
      %p223 = por %p221, %p222
      %p225 = scmp.ne.s32.totalorder %s208, %s224
      %p226 = scmp.eq.s32.totalorder %s25, 0
      %p227 = por %p225, %p226
      %s228 = ssub.s32 %s26, %s38
      %s229 = ssub.s32 %s27, %s34
      %s230 = sor.u32 %s228, %s229
      %p231 = scmp.eq.s32.totalorder %s230, 0
      %s233 = sadd.s32 %s232, 1
      %s234 = scalar_select %p231, %s232, %s233
      %p237 = pneg %p231
      %p238 = scmp.eq.s32.totalorder %s19, 3
      %p239 = por %p237, %p238
      %p240 = scmp.ne.s32.totalorder %s232, %s235
      %p241 = scmp.eq.s32.totalorder %s19, 0
      %p242 = por %p240, %p241
      %p243 = scmp.ne.s32.totalorder %s232, %s235
      %p244 = scmp.eq.s32.totalorder %s24, 3
      %p245 = por %p243, %p244
      %p246 = scmp.ne.s32.totalorder %s235, %s236
      %p247 = scmp.eq.s32.totalorder %s24, 0
      %p248 = por %p246, %p247
      %p249 = scmp.ne.s32.totalorder %s235, %s236
      %p250 = scmp.eq.s32.totalorder %s25, 3
      %p251 = por %p249, %p250
      %p253 = scmp.ne.s32.totalorder %s236, %s252
      %p254 = scmp.eq.s32.totalorder %s25, 0
      %p255 = por %p253, %p254
      %p256 = scmp.le.s32.totalorder 1, %s19
      %p257 = scmp.lt.s32.totalorder %s19, 5
      %p258 = pnand %p256, %p257
      %p259 = pneg %p258
      // Predicated region
      $region9: #{tpu_custom_call.1} parent=5 // pred_check
        _
      $region10: #{tpu_custom_call.1} parent=5 // pred_check_branch
        %261 = sbr.rel (%p258) target = $region12
      $region11: #{tpu_custom_call.1} parent=5 // pred_region
        %s262 = ssub.s32 %s19, 1
        // Predicated region
        $region13: #{tpu_custom_call.1} parent=11 // pred_check
          %p263 = pneg %p80
        $region14: #{tpu_custom_call.1} parent=11 // pred_check_branch
          %265 = sbr.rel (%p263) target = $region16
        $region15: #{tpu_custom_call.1} parent=11 // pred_region
          _
        $region16: #{tpu_custom_call.1} parent=11 // pred_fallthru
          _
        // Predicated region
        $region17: #{tpu_custom_call.1} parent=11 // pred_check
          %p266 = pneg %p101
        $region18: #{tpu_custom_call.1} parent=11 // pred_check_branch
          %268 = sbr.rel (%p266) target = $region20
        $region19: #{tpu_custom_call.1} parent=11 // pred_region
          _
        $region20: #{tpu_custom_call.1} parent=11 // pred_fallthru
          _
        // Predicated region
        $region21: #{tpu_custom_call.1} parent=11 // pred_check
          %p269 = pneg %p122
        $region22: #{tpu_custom_call.1} parent=11 // pred_check_branch
          %271 = sbr.rel (%p269) target = $region24
        $region23: #{tpu_custom_call.1} parent=11 // pred_region
          %s273 = ssub.s32 256, 256
          %274 = vsyncadd [#allocation5], %s273
          %s275 = sshll.u32 [#allocation4], 4
          %s276 = int_to_ptr.vmem [resolvable:$true] %s275
          %281 = dma.hbm_to_vmem [thread:$0]  %s3, 256, %s276, [#allocation5], 64, 64, 4
        $region24: #{tpu_custom_call.1} parent=11 // pred_fallthru
          _
        // Predicated region
        $region25: #{tpu_custom_call.1} parent=11 // pred_check
          %p282 = pneg %p143
        $region26: #{tpu_custom_call.1} parent=11 // pred_check_branch
          %284 = sbr.rel (%p282) target = $region28
        $region27: #{tpu_custom_call.1} parent=11 // pred_region
          %s286 = ssub.s32 256, 256
          %287 = vsyncadd [#allocation5], %s286
          %s288 = sshll.u32 [#allocation6], 4
          %s289 = int_to_ptr.vmem [resolvable:$true] %s288
          %294 = dma.hbm_to_vmem [thread:$0]  %s4, 256, %s289, [#allocation5], 64, 64, 4
        $region28: #{tpu_custom_call.1} parent=11 // pred_fallthru
          _
        // Predicated region
        $region29: #{tpu_custom_call.1} parent=11 // pred_check
          %p295 = pneg %p164
        $region30: #{tpu_custom_call.1} parent=11 // pred_check_branch
          %297 = sbr.rel (%p295) target = $region32
        $region31: #{tpu_custom_call.1} parent=11 // pred_region
          _
        $region32: #{tpu_custom_call.1} parent=11 // pred_fallthru
          _
      $region12: #{tpu_custom_call.1} parent=5 // pred_fallthru
        _
      %p298 = scmp.lt.s32.totalorder %s19, 4
      // Predicated region
      $region33: #{tpu_custom_call.1} parent=5 // pred_check
        %p299 = pneg %p298
      $region34: #{tpu_custom_call.1} parent=5 // pred_check_branch
        %301 = sbr.rel (%p299) target = $region36
      $region35: #{tpu_custom_call.1} parent=5 // pred_region
        // Predicated region
        $region37: #{tpu_custom_call.1} parent=35 // pred_check
          %p302 = pneg %p53
        $region38: #{tpu_custom_call.1} parent=35 // pred_check_branch
          %304 = sbr.rel (%p302) target = $region40
        $region39: #{tpu_custom_call.1} parent=35 // pred_region
          %s305 = sand.u32 %s43, 1
          %s306 = scalar_lea.sflag [#allocation3], %s305
          %s307 = sand.u32 %s43, 1
          %s308 = smul.addr %s307, 8
          %s309 = scalar_lea.vmem [#allocation2], %s308
          %s311 = ssub.s32 128, 128
          %312 = vsyncadd %s306, %s311
          %s313 = smul.addr %s26, 2
          %s314 = sadd.s32 %s27, %s313
          %s315 = smul.addr %s314, 128
          %s316 = scalar_lea.hbm %s0, %s315
          %s318 = sshll.u32 %s309, 4
          %s319 = int_to_ptr.vmem [resolvable:$true] %s318
          %321 = dma.hbm_to_vmem [thread:$0]  %s316, 128, %s319, %s306
        $region40: #{tpu_custom_call.1} parent=35 // pred_fallthru
          _
      $region36: #{tpu_custom_call.1} parent=5 // pred_fallthru
        _
      %p322 = scmp.le.s32.totalorder 1, %s19
      %p323 = scmp.lt.s32.totalorder %s19, 5
      %p324 = pnand %p322, %p323
      %p325 = pneg %p324
      // Predicated region
      $region41: #{tpu_custom_call.1} parent=5 // pred_check
        _
      $region42: #{tpu_custom_call.1} parent=5 // pred_check_branch
        %327 = sbr.rel (%p324) target = $region44
      $region43: #{tpu_custom_call.1} parent=5 // pred_region
        %s328 = ssub.s32 %s19, 1
        %s329 = sand.u32 %s46, 1
        %s330 = scalar_lea.sflag [#allocation3], %s329
        %s331 = sand.u32 %s46, 1
        %s332 = smul.addr %s331, 8
        %s333 = scalar_lea.vmem [#allocation2], %s332
        // Predicated region
        $region45: #{tpu_custom_call.1} parent=43 // pred_check
          %p334 = pneg %p59
        $region46: #{tpu_custom_call.1} parent=43 // pred_check_branch
          %336 = sbr.rel (%p334) target = $region48
        $region47: #{tpu_custom_call.1} parent=43 // pred_region
          %337 = dma.done %s330, 128
        $region48: #{tpu_custom_call.1} parent=43 // pred_fallthru
          _
        // Predicated region
        $region49: #{tpu_custom_call.1} parent=43 // pred_check
          %p338 = pneg %p122
        $region50: #{tpu_custom_call.1} parent=43 // pred_check_branch
          %340 = sbr.rel (%p338) target = $region52
        $region51: #{tpu_custom_call.1} parent=43 // pred_region
          %341 = dma.done [#allocation5], 256
        $region52: #{tpu_custom_call.1} parent=43 // pred_fallthru
          _
        // Predicated region
        $region53: #{tpu_custom_call.1} parent=43 // pred_check
          %p342 = pneg %p143
        $region54: #{tpu_custom_call.1} parent=43 // pred_check_branch
          %344 = sbr.rel (%p342) target = $region56
        $region55: #{tpu_custom_call.1} parent=43 // pred_region
          %345 = dma.done [#allocation5], 256
        $region56: #{tpu_custom_call.1} parent=43 // pred_fallthru
          _
        %s346 = sand.u32 %s46, 1
        %s347 = scalar_lea.sflag [#allocation3], %s346
        %s348 = sand.u32 %s46, 1
        %s349 = smul.addr %s348, 8
        %s350 = scalar_lea.vmem [#allocation2], %s349
        %p351 = pneg %p59
        %p352 = pneg %p56
        %p353 = pneg %p80
        %p354 = pneg %p77
        %p355 = pneg %p101
        %p356 = pneg %p98
        %p357 = pneg %p122
        %p358 = pneg %p119
        %p359 = pneg %p143
        %p360 = pneg %p140
        %p361 = pneg %p164
        %p362 = pneg %p161
        %p363 = pneg %p192
        %p364 = pneg %p189
        %s365 = sand.u32 %s179, 1
        %s366 = sand.u32 %s179, 1
        %s367 = smul.addr %s366, 16
        %s368 = scalar_lea.vmem [#allocation7], %s367
        %p369 = pneg %p220
        %p370 = pneg %p217
        %s371 = sand.u32 %s207, 1
        %s372 = sand.u32 %s207, 1
        %s373 = smul.addr %s372, 16
        %s374 = scalar_lea.vmem [#allocation8], %s373
        %p375 = pneg %p248
        %p376 = pneg %p245
        %s377 = sand.u32 %s235, 1
        %s378 = sand.u32 %s235, 1
        %s379 = smul.addr %s378, 16
        %s380 = scalar_lea.vmem [#allocation9], %s379
        %v382 = vld [vmem:[%s333] sm:$0xff]
        %v383 = vld [vmem:[%s1] sm:$0x1]
        %v384 = vld [vmem:[%s2] sm:$0x1]
        %vm385 = vcmask 261120
        %v386 = vsel %vm385, %v382, 0.0
        %387 = vadd.xlane.f32.xlu0 %v386
        %v388 = vpop.xlane.xlu0 %387
        %v389 = vrcp.pop 32.0
        %v390 = vmul.f32 %v388, %v389
        %v391 = vsub.f32 %v382, %v390
        %v392 = vmul.f32 %v391, %v391
        %v393 = vsel %vm385, %v392, 0.0
        %394 = vadd.xlane.f32.xlu0 %v393
        %v395 = vpop.xlane.xlu0 %394
        %v396 = vmul.f32 %v395, %v389
        %v397 = vadd.f32 %v396, 1e-05
        %v398 = vrsqrt.pop %v397
        %v399 = vmul.f32 %v391, %v398
        %v401 = vlaneseq
        %v402 = vshrl.u32 %v401, 7
        %v403 = vsub.s32 0, %v402
        %v404 = vrot.slane %v383, %v403
        %v406 = vmul.f32 %v399, %v404
        %v408 = vlaneseq
        %v409 = vshrl.u32 %v408, 7
        %v410 = vsub.s32 0, %v409
        %v411 = vrot.slane %v384, %v410
        %v413 = vadd.f32 %v406, %v411
        %v414 = vpack.c.bf16 %v413, %v413
        %v415 = vld [vmem:[#allocation4] sm:$0xf]
        %v416 = vld [vmem:[#allocation4 + $0x4] sm:$0xf]
        %v417 = vld [vmem:[#allocation4 + $0x8] sm:$0xf]
        %v418 = vld [vmem:[#allocation4 + $0xc] sm:$0xf]
        %v423 = vunpack.c.l.b16 %v415
        %v424 = vunpack.c.l.b16 %v416
        %v425 = vunpack.c.l.b16 %v417
        %v426 = vunpack.c.l.b16 %v418
        %v427 = vpack.c.b16 %v424, %v423
        %v428 = vpack.c.b16 %v426, %v425
        %v432 = vsel %vm385, %v414, 0
        %434 = vmatprep.subr.bf16.mxu0 0
        %435 = vmatpush1.bf16.msra.mxu0 %v427
        %436 = vmatprep.subr.bf16.mxu0 0
        %437 = vmatpush1.bf16.msra.mxu0 %v428
        %438 = vmatprep.subr.bf16.mxu0 0
        %439 = vmatpush1.bf16.msra.mxu0 0
        %440 = vmatprep.subr.bf16.mxu0 0
        %441 = vmatpush1.bf16.msra.mxu0 0
        %442 = vmatprep.subr.bf16.mxu0 0
        %443 = vmatpush1.bf16.msra.mxu0 0
        %444 = vmatprep.subr.bf16.mxu0 0
        %445 = vmatpush1.bf16.msra.mxu0 0
        %446 = vmatprep.subr.bf16.mxu0 0
        %447 = vmatpush1.bf16.msra.mxu0 0
        %448 = vmatprep.subr.bf16.mxu0 0
        %449 = vmatpush1.bf16.msra.mxu0 0
        %450 = vmatprep.subr.bf16.mxu0 0
        %451 = vmatpush1.bf16.msra.mxu0 0
        %452 = vmatprep.subr.bf16.mxu0 0
        %453 = vmatpush1.bf16.msra.mxu0 0
        %454 = vmatprep.subr.bf16.mxu0 0
        %455 = vmatpush1.bf16.msra.mxu0 0
        %456 = vmatprep.subr.bf16.mxu0 0
        %457 = vmatpush1.bf16.msra.mxu0 0
        %458 = vmatprep.subr.bf16.mxu0 0
        %459 = vmatpush1.bf16.msra.mxu0 0
        %460 = vmatprep.subr.bf16.mxu0 0
        %461 = vmatpush1.bf16.msra.mxu0 0
        %462 = vmatprep.subr.bf16.mxu0 0
        %463 = vmatpush1.bf16.msra.mxu0 0
        %464 = vmatprep.subr.bf16.mxu0 0
        %465 = vmatpush1.bf16.msra.mxu0 0
        %466 = vmatprep.mubr.bf16.mxu0 0
        %467 = vmatmul.mubr.bf16.gmra.mrb[0].mxu0 %v432
        %v468 = vpop.f32.mrb[0].mxu0
        %v469 = vadd.f32 0.0, %v468
        %v470 = vpop.f32.mrb[0].mxu0
        %v471 = vpop.f32.mrb[0].mxu0
        %v472 = vpop.f32.mrb[0].mxu0
        %473 = vdwg.mxu0
        %v474 = vmul.f32 %v469, 0.35355338
        %v475 = vld [vmem:[#allocation6] sm:$0xf]
        %v476 = vld [vmem:[#allocation6 + $0x4] sm:$0xf]
        %v477 = vld [vmem:[#allocation6 + $0x8] sm:$0xf]
        %v478 = vld [vmem:[#allocation6 + $0xc] sm:$0xf]
        %v483 = vunpack.c.l.b16 %v475
        %v484 = vunpack.c.l.b16 %v476
        %v485 = vunpack.c.l.b16 %v477
        %v486 = vunpack.c.l.b16 %v478
        %v487 = vpack.c.b16 %v484, %v483
        %v488 = vpack.c.b16 %v486, %v485
        %491 = vmatprep.subr.bf16.mxu0 0
        %492 = vmatpush1.bf16.msra.mxu0 %v487
        %493 = vmatprep.subr.bf16.mxu0 0
        %494 = vmatpush1.bf16.msra.mxu0 %v488
        %495 = vmatprep.subr.bf16.mxu0 0
        %496 = vmatpush1.bf16.msra.mxu0 0
        %497 = vmatprep.subr.bf16.mxu0 0
        %498 = vmatpush1.bf16.msra.mxu0 0
        %499 = vmatprep.subr.bf16.mxu0 0
        %500 = vmatpush1.bf16.msra.mxu0 0
        %501 = vmatprep.subr.bf16.mxu0 0
        %502 = vmatpush1.bf16.msra.mxu0 0
        %503 = vmatprep.subr.bf16.mxu0 0
        %504 = vmatpush1.bf16.msra.mxu0 0
        %505 = vmatprep.subr.bf16.mxu0 0
        %506 = vmatpush1.bf16.msra.mxu0 0
        %507 = vmatprep.subr.bf16.mxu0 0
        %508 = vmatpush1.bf16.msra.mxu0 0
        %509 = vmatprep.subr.bf16.mxu0 0
        %510 = vmatpush1.bf16.msra.mxu0 0
        %511 = vmatprep.subr.bf16.mxu0 0
        %512 = vmatpush1.bf16.msra.mxu0 0
        %513 = vmatprep.subr.bf16.mxu0 0
        %514 = vmatpush1.bf16.msra.mxu0 0
        %515 = vmatprep.subr.bf16.mxu0 0
        %516 = vmatpush1.bf16.msra.mxu0 0
        %517 = vmatprep.subr.bf16.mxu0 0
        %518 = vmatpush1.bf16.msra.mxu0 0
        %519 = vmatprep.subr.bf16.mxu0 0
        %520 = vmatpush1.bf16.msra.mxu0 0
        %521 = vmatprep.subr.bf16.mxu0 0
        %522 = vmatpush1.bf16.msra.mxu0 0
        %523 = vmatprep.mubr.bf16.mxu0 0
        %524 = vmatmul.mubr.bf16.gmra.mrb[0].mxu0 %v432
        %v525 = vpop.f32.mrb[0].mxu0
        %v526 = vadd.f32 0.0, %v525
        %v527 = vpop.f32.mrb[0].mxu0
        %v528 = vpop.f32.mrb[0].mxu0
        %v529 = vpop.f32.mrb[0].mxu0
        %530 = vdwg.mxu0
        %v531 = vld [vmem:[%s5] sm:$0xf]
        %v532 = vld [vmem:[%s5 + $0x4] sm:$0xf]
        %v533 = vld [vmem:[%s5 + $0x8] sm:$0xf]
        %v534 = vld [vmem:[%s5 + $0xc] sm:$0xf]
        %v539 = vunpack.c.l.b16 %v531
        %v540 = vunpack.c.l.b16 %v532
        %v541 = vunpack.c.l.b16 %v533
        %v542 = vunpack.c.l.b16 %v534
        %v543 = vpack.c.b16 %v540, %v539
        %v544 = vpack.c.b16 %v542, %v541
        %547 = vmatprep.subr.bf16.mxu0 0
        %548 = vmatpush1.bf16.msra.mxu0 %v543
        %549 = vmatprep.subr.bf16.mxu0 0
        %550 = vmatpush1.bf16.msra.mxu0 %v544
        %551 = vmatprep.subr.bf16.mxu0 0
        %552 = vmatpush1.bf16.msra.mxu0 0
        %553 = vmatprep.subr.bf16.mxu0 0
        %554 = vmatpush1.bf16.msra.mxu0 0
        %555 = vmatprep.subr.bf16.mxu0 0
        %556 = vmatpush1.bf16.msra.mxu0 0
        %557 = vmatprep.subr.bf16.mxu0 0
        %558 = vmatpush1.bf16.msra.mxu0 0
        %559 = vmatprep.subr.bf16.mxu0 0
        %560 = vmatpush1.bf16.msra.mxu0 0
        %561 = vmatprep.subr.bf16.mxu0 0
        %562 = vmatpush1.bf16.msra.mxu0 0
        %563 = vmatprep.subr.bf16.mxu0 0
        %564 = vmatpush1.bf16.msra.mxu0 0
        %565 = vmatprep.subr.bf16.mxu0 0
        %566 = vmatpush1.bf16.msra.mxu0 0
        %567 = vmatprep.subr.bf16.mxu0 0
        %568 = vmatpush1.bf16.msra.mxu0 0
        %569 = vmatprep.subr.bf16.mxu0 0
        %570 = vmatpush1.bf16.msra.mxu0 0
        %571 = vmatprep.subr.bf16.mxu0 0
        %572 = vmatpush1.bf16.msra.mxu0 0
        %573 = vmatprep.subr.bf16.mxu0 0
        %574 = vmatpush1.bf16.msra.mxu0 0
        %575 = vmatprep.subr.bf16.mxu0 0
        %576 = vmatpush1.bf16.msra.mxu0 0
        %577 = vmatprep.subr.bf16.mxu0 0
        %578 = vmatpush1.bf16.msra.mxu0 0
        %579 = vmatprep.mubr.bf16.mxu0 0
        %580 = vmatmul.mubr.bf16.gmra.mrb[0].mxu0 %v432
        %v581 = vpop.f32.mrb[0].mxu0
        %v582 = vadd.f32 0.0, %v581
        %v583 = vpop.f32.mrb[0].mxu0
        %v584 = vpop.f32.mrb[0].mxu0
        %v585 = vpop.f32.mrb[0].mxu0
        %586 = vdwg.mxu0
        %v587 = vpack.c.bf16 %v474, %v474
        %v588 = vpack.c.bf16 %v526, %v526
        %v589 = vpack.c.bf16 %v582, %v582
        %vm590 = vcmask 60416
        %591 = vst.msk [vmem:[%s368] sm:$0xf] %vm590, %v587
        %592 = vst.msk [vmem:[%s374] sm:$0xf] %vm590, %v588
        %593 = vst.msk [vmem:[%s380] sm:$0xf] %vm590, %v589
        %v595 = vunpack.c.l.b16 %v587
        %v596 = vpack.c.b16 %v595, %v595
        %597 = vrot.lane.b32.xlu0 %v596, 120
        %v598 = vpop.permute.xlu0 %597
        %s600 = scalar_lea.vmem %s368, 4 [#allocation7]
        %601 = vst.msk [vmem:[%s600] sm:$0xf] %vm590, %v598
        %v603 = vunpack.c.l.b16 %v588
        %v604 = vpack.c.b16 %v603, %v603
        %605 = vrot.lane.b32.xlu0 %v604, 120
        %v606 = vpop.permute.xlu0 %605
        %s608 = scalar_lea.vmem %s374, 4 [#allocation8]
        %609 = vst.msk [vmem:[%s608] sm:$0xf] %vm590, %v606
        %v611 = vunpack.c.l.b16 %v589
        %v612 = vpack.c.b16 %v611, %v611
        %613 = vrot.lane.b32.xlu0 %v612, 120
        %v614 = vpop.permute.xlu0 %613
        %s616 = scalar_lea.vmem %s380, 4 [#allocation9]
        %617 = vst.msk [vmem:[%s616] sm:$0xf] %vm590, %v614
        %618 = vrot.lane.b32.xlu0 %v596, 112
        %v619 = vpop.permute.xlu0 %618
        %s621 = scalar_lea.vmem %s368, 8 [#allocation7]
        %622 = vst.msk [vmem:[%s621] sm:$0xf] %vm590, %v619
        %623 = vrot.lane.b32.xlu0 %v604, 112
        %v624 = vpop.permute.xlu0 %623
        %s626 = scalar_lea.vmem %s374, 8 [#allocation8]
        %627 = vst.msk [vmem:[%s626] sm:$0xf] %vm590, %v624
        %628 = vrot.lane.b32.xlu0 %v612, 112
        %v629 = vpop.permute.xlu0 %628
        %s631 = scalar_lea.vmem %s380, 8 [#allocation9]
        %632 = vst.msk [vmem:[%s631] sm:$0xf] %vm590, %v629
        %633 = vrot.lane.b32.xlu0 %v596, 104
        %v634 = vpop.permute.xlu0 %633
        %s636 = scalar_lea.vmem %s368, 12 [#allocation7]
        %637 = vst.msk [vmem:[%s636] sm:$0xf] %vm590, %v634
        %638 = vrot.lane.b32.xlu0 %v604, 104
        %v639 = vpop.permute.xlu0 %638
        %s641 = scalar_lea.vmem %s374, 12 [#allocation8]
        %642 = vst.msk [vmem:[%s641] sm:$0xf] %vm590, %v639
        %643 = vrot.lane.b32.xlu0 %v612, 104
        %v644 = vpop.permute.xlu0 %643
        %s646 = scalar_lea.vmem %s380, 12 [#allocation9]
        %647 = vst.msk [vmem:[%s646] sm:$0xf] %vm590, %v644
        %s648 = sand.u32 %s179, 1
        %s649 = sand.u32 %s179, 1
        %s650 = smul.addr %s649, 16
        %s651 = scalar_lea.vmem [#allocation7], %s650
        %s652 = sand.u32 %s207, 1
        %s653 = sand.u32 %s207, 1
        %s654 = smul.addr %s653, 16
        %s655 = scalar_lea.vmem [#allocation8], %s654
        %s656 = sand.u32 %s235, 1
        %s657 = sand.u32 %s235, 1
        %s658 = smul.addr %s657, 16
        %s659 = scalar_lea.vmem [#allocation9], %s658
        // Predicated region
        $region57: #{tpu_custom_call.1} parent=43 // pred_check
          %p660 = pneg %p189
        $region58: #{tpu_custom_call.1} parent=43 // pred_check_branch
          %662 = sbr.rel (%p660) target = $region60
        $region59: #{tpu_custom_call.1} parent=43 // pred_region
          %s663 = smul.addr %s28, 8
          %s664 = sadd.s32 %s29, %s663
          %s665 = smul.addr %s664, 4
          %s666 = scalar_lea.vmem %s6, %s665
          // Predicated region
          $region61: #{tpu_custom_call.1} parent=59 // pred_check
            _
          $region62: #{tpu_custom_call.1} parent=59 // pred_check_branch
            %668 = sbr.rel (0) target = $region64
          $region63: #{tpu_custom_call.1} parent=59 // pred_region
            // Predicated region
            $region65: #{tpu_custom_call.1} parent=63 // pred_check
              _
            $region66: #{tpu_custom_call.1} parent=63 // pred_check_branch
              %670 = sbr.rel target = $region68
            $region67: #{tpu_custom_call.1} parent=63 // pred_region
              // Predicated region
              $region80: #{tpu_custom_call.1} parent=67 // pred_check
                _
              $region81: #{tpu_custom_call.1} parent=67 // pred_check_branch
                %691 = sbr.rel (0) target = $region83
              $region82: #{tpu_custom_call.1} parent=67 // pred_region
                loop: start=0, step=1, limit=1
                $region84: #{tpu_custom_call.1} parent=82 // loop_pre_header
                  _
                $region85: #{tpu_custom_call.1} parent=82 // loop_header
                  %s693 = sphi 0, %s697
                  %p694 = scmp.ge.s32.totalorder %s693, 1
                  %s698 = sphi %s651, %s651
                  %s699 = sphi %s666, %s666
                $region86: #{tpu_custom_call.1} parent=82 // loop_header_branch
                  %696 = sbr.rel (%p694) target = $region90
                $region87: #{tpu_custom_call.1} parent=82 // loop_body
                  _
                $region88: #{tpu_custom_call.1} parent=82 // loop_footer
                  %s697 = sadd.s32 1, %s693
                $region89: #{tpu_custom_call.1} parent=82 // loop_footer_branch
                  %692 = sbr.rel target = $region85
                $region90: #{tpu_custom_call.1} parent=82 // loop_exit
                  _
                loop: start=0, step=1, limit=1
                $region91: #{tpu_custom_call.1} parent=82 // loop_pre_header
                  _
                $region92: #{tpu_custom_call.1} parent=82 // loop_header
                  %s702 = sphi 0, %s706
                  %p703 = scmp.ge.s32.totalorder %s702, 1
                  %s707 = sphi %s651, %s651
                  %s708 = sphi %s666, %s666
                $region93: #{tpu_custom_call.1} parent=82 // loop_header_branch
                  %705 = sbr.rel (%p703) target = $region97
                $region94: #{tpu_custom_call.1} parent=82 // loop_body
                  %v709 = vld [vmem:[%s707] sm:$0xf]
                  %710 = vst [vmem:[%s708] sm:$0xf] %v709
                  %v711 = vld [vmem:[%s707 + $0x4] sm:$0xf]
                  %712 = vst [vmem:[%s708 + $0x8] sm:$0xf] %v711
                  %v713 = vld [vmem:[%s707 + $0x8] sm:$0xf]
                  %714 = vst [vmem:[%s708 + $0x10] sm:$0xf] %v713
                  %v715 = vld [vmem:[%s707 + $0xc] sm:$0xf]
                  %716 = vst [vmem:[%s708 + $0x18] sm:$0xf] %v715
                $region95: #{tpu_custom_call.1} parent=82 // loop_footer
                  %s706 = sadd.s32 1, %s702
                $region96: #{tpu_custom_call.1} parent=82 // loop_footer_branch
                  %701 = sbr.rel target = $region92
                $region97: #{tpu_custom_call.1} parent=82 // loop_exit
                  _
              $region83: #{tpu_custom_call.1} parent=67 // pred_fallthru
                _
            $region68: #{tpu_custom_call.1} parent=63 // pred_fallthru
              _
            // Predicated region
            $region69: #{tpu_custom_call.1} parent=63 // pred_check
              _
            $region70: #{tpu_custom_call.1} parent=63 // pred_check_branch
              %672 = sbr.rel (0) target = $region72
            $region71: #{tpu_custom_call.1} parent=63 // pred_region
              loop: start=0, step=1, limit=1
              $region73: #{tpu_custom_call.1} parent=71 // loop_pre_header
                _
              $region74: #{tpu_custom_call.1} parent=71 // loop_header
                %s675 = sphi 0, %s679
                %p676 = scmp.ge.s32.totalorder %s675, 1
                %s680 = sphi %s651, %s651
                %s681 = sphi %s666, %s666
              $region75: #{tpu_custom_call.1} parent=71 // loop_header_branch
                %678 = sbr.rel (%p676) target = $region79
              $region76: #{tpu_custom_call.1} parent=71 // loop_body
                %v682 = vld [vmem:[%s680] sm:$0xf]
                %683 = vst [vmem:[%s681] sm:$0xf] %v682
                %v684 = vld [vmem:[%s680 + $0x4] sm:$0xf]
                %685 = vst [vmem:[%s681 + $0x8] sm:$0xf] %v684
                %v686 = vld [vmem:[%s680 + $0x8] sm:$0xf]
                %687 = vst [vmem:[%s681 + $0x10] sm:$0xf] %v686
                %v688 = vld [vmem:[%s680 + $0xc] sm:$0xf]
                %689 = vst [vmem:[%s681 + $0x18] sm:$0xf] %v688
              $region77: #{tpu_custom_call.1} parent=71 // loop_footer
                %s679 = sadd.s32 1, %s675
              $region78: #{tpu_custom_call.1} parent=71 // loop_footer_branch
                %674 = sbr.rel target = $region74
              $region79: #{tpu_custom_call.1} parent=71 // loop_exit
                _
            $region72: #{tpu_custom_call.1} parent=63 // pred_fallthru
              _
          $region64: #{tpu_custom_call.1} parent=59 // pred_fallthru
            _
          %717 = vnop
        $region60: #{tpu_custom_call.1} parent=43 // pred_fallthru
          _
        // Predicated region
        $region98: #{tpu_custom_call.1} parent=43 // pred_check
          %p718 = pneg %p217
        $region99: #{tpu_custom_call.1} parent=43 // pred_check_branch
          %720 = sbr.rel (%p718) target = $region101
        $region100: #{tpu_custom_call.1} parent=43 // pred_region
          %s721 = smul.addr %s28, 8
          %s722 = sadd.s32 %s29, %s721
          %s723 = smul.addr %s722, 4
          %s724 = scalar_lea.vmem %s7, %s723
          // Predicated region
          $region102: #{tpu_custom_call.1} parent=100 // pred_check
            _
          $region103: #{tpu_custom_call.1} parent=100 // pred_check_branch
            %726 = sbr.rel (0) target = $region105
          $region104: #{tpu_custom_call.1} parent=100 // pred_region
            // Predicated region
            $region106: #{tpu_custom_call.1} parent=104 // pred_check
              _
            $region107: #{tpu_custom_call.1} parent=104 // pred_check_branch
              %728 = sbr.rel target = $region109
            $region108: #{tpu_custom_call.1} parent=104 // pred_region
              // Predicated region
              $region121: #{tpu_custom_call.1} parent=108 // pred_check
                _
              $region122: #{tpu_custom_call.1} parent=108 // pred_check_branch
                %749 = sbr.rel (0) target = $region124
              $region123: #{tpu_custom_call.1} parent=108 // pred_region
                loop: start=0, step=1, limit=1
                $region125: #{tpu_custom_call.1} parent=123 // loop_pre_header
                  _
                $region126: #{tpu_custom_call.1} parent=123 // loop_header
                  %s751 = sphi 0, %s755
                  %p752 = scmp.ge.s32.totalorder %s751, 1
                  %s756 = sphi %s655, %s655
                  %s757 = sphi %s724, %s724
                $region127: #{tpu_custom_call.1} parent=123 // loop_header_branch
                  %754 = sbr.rel (%p752) target = $region131
                $region128: #{tpu_custom_call.1} parent=123 // loop_body
                  _
                $region129: #{tpu_custom_call.1} parent=123 // loop_footer
                  %s755 = sadd.s32 1, %s751
                $region130: #{tpu_custom_call.1} parent=123 // loop_footer_branch
                  %750 = sbr.rel target = $region126
                $region131: #{tpu_custom_call.1} parent=123 // loop_exit
                  _
                loop: start=0, step=1, limit=1
                $region132: #{tpu_custom_call.1} parent=123 // loop_pre_header
                  _
                $region133: #{tpu_custom_call.1} parent=123 // loop_header
                  %s760 = sphi 0, %s764
                  %p761 = scmp.ge.s32.totalorder %s760, 1
                  %s765 = sphi %s655, %s655
                  %s766 = sphi %s724, %s724
                $region134: #{tpu_custom_call.1} parent=123 // loop_header_branch
                  %763 = sbr.rel (%p761) target = $region138
                $region135: #{tpu_custom_call.1} parent=123 // loop_body
                  %v767 = vld [vmem:[%s765] sm:$0xf]
                  %768 = vst [vmem:[%s766] sm:$0xf] %v767
                  %v769 = vld [vmem:[%s765 + $0x4] sm:$0xf]
                  %770 = vst [vmem:[%s766 + $0x8] sm:$0xf] %v769
                  %v771 = vld [vmem:[%s765 + $0x8] sm:$0xf]
                  %772 = vst [vmem:[%s766 + $0x10] sm:$0xf] %v771
                  %v773 = vld [vmem:[%s765 + $0xc] sm:$0xf]
                  %774 = vst [vmem:[%s766 + $0x18] sm:$0xf] %v773
                $region136: #{tpu_custom_call.1} parent=123 // loop_footer
                  %s764 = sadd.s32 1, %s760
                $region137: #{tpu_custom_call.1} parent=123 // loop_footer_branch
                  %759 = sbr.rel target = $region133
                $region138: #{tpu_custom_call.1} parent=123 // loop_exit
                  _
              $region124: #{tpu_custom_call.1} parent=108 // pred_fallthru
                _
            $region109: #{tpu_custom_call.1} parent=104 // pred_fallthru
              _
            // Predicated region
            $region110: #{tpu_custom_call.1} parent=104 // pred_check
              _
            $region111: #{tpu_custom_call.1} parent=104 // pred_check_branch
              %730 = sbr.rel (0) target = $region113
            $region112: #{tpu_custom_call.1} parent=104 // pred_region
              loop: start=0, step=1, limit=1
              $region114: #{tpu_custom_call.1} parent=112 // loop_pre_header
                _
              $region115: #{tpu_custom_call.1} parent=112 // loop_header
                %s733 = sphi 0, %s737
                %p734 = scmp.ge.s32.totalorder %s733, 1
                %s738 = sphi %s655, %s655
                %s739 = sphi %s724, %s724
              $region116: #{tpu_custom_call.1} parent=112 // loop_header_branch
                %736 = sbr.rel (%p734) target = $region120
              $region117: #{tpu_custom_call.1} parent=112 // loop_body
                %v740 = vld [vmem:[%s738] sm:$0xf]
                %741 = vst [vmem:[%s739] sm:$0xf] %v740
                %v742 = vld [vmem:[%s738 + $0x4] sm:$0xf]
                %743 = vst [vmem:[%s739 + $0x8] sm:$0xf] %v742
                %v744 = vld [vmem:[%s738 + $0x8] sm:$0xf]
                %745 = vst [vmem:[%s739 + $0x10] sm:$0xf] %v744
                %v746 = vld [vmem:[%s738 + $0xc] sm:$0xf]
                %747 = vst [vmem:[%s739 + $0x18] sm:$0xf] %v746
              $region118: #{tpu_custom_call.1} parent=112 // loop_footer
                %s737 = sadd.s32 1, %s733
              $region119: #{tpu_custom_call.1} parent=112 // loop_footer_branch
                %732 = sbr.rel target = $region115
              $region120: #{tpu_custom_call.1} parent=112 // loop_exit
                _
            $region113: #{tpu_custom_call.1} parent=104 // pred_fallthru
              _
          $region105: #{tpu_custom_call.1} parent=100 // pred_fallthru
            _
          %775 = vnop
        $region101: #{tpu_custom_call.1} parent=43 // pred_fallthru
          _
        // Predicated region
        $region139: #{tpu_custom_call.1} parent=43 // pred_check
          %p776 = pneg %p245
        $region140: #{tpu_custom_call.1} parent=43 // pred_check_branch
          %778 = sbr.rel (%p776) target = $region142
        $region141: #{tpu_custom_call.1} parent=43 // pred_region
          %s779 = smul.addr %s28, 8
          %s780 = sadd.s32 %s29, %s779
          %s781 = smul.addr %s780, 4
          %s782 = scalar_lea.vmem %s8, %s781
          // Predicated region
          $region143: #{tpu_custom_call.1} parent=141 // pred_check
            _
          $region144: #{tpu_custom_call.1} parent=141 // pred_check_branch
            %784 = sbr.rel (0) target = $region146
          $region145: #{tpu_custom_call.1} parent=141 // pred_region
            // Predicated region
            $region147: #{tpu_custom_call.1} parent=145 // pred_check
              _
            $region148: #{tpu_custom_call.1} parent=145 // pred_check_branch
              %786 = sbr.rel target = $region150
            $region149: #{tpu_custom_call.1} parent=145 // pred_region
              // Predicated region
              $region162: #{tpu_custom_call.1} parent=149 // pred_check
                _
              $region163: #{tpu_custom_call.1} parent=149 // pred_check_branch
                %807 = sbr.rel (0) target = $region165
              $region164: #{tpu_custom_call.1} parent=149 // pred_region
                loop: start=0, step=1, limit=1
                $region166: #{tpu_custom_call.1} parent=164 // loop_pre_header
                  _
                $region167: #{tpu_custom_call.1} parent=164 // loop_header
                  %s809 = sphi 0, %s813
                  %p810 = scmp.ge.s32.totalorder %s809, 1
                  %s814 = sphi %s659, %s659
                  %s815 = sphi %s782, %s782
                $region168: #{tpu_custom_call.1} parent=164 // loop_header_branch
                  %812 = sbr.rel (%p810) target = $region172
                $region169: #{tpu_custom_call.1} parent=164 // loop_body
                  _
                $region170: #{tpu_custom_call.1} parent=164 // loop_footer
                  %s813 = sadd.s32 1, %s809
                $region171: #{tpu_custom_call.1} parent=164 // loop_footer_branch
                  %808 = sbr.rel target = $region167
                $region172: #{tpu_custom_call.1} parent=164 // loop_exit
                  _
                loop: start=0, step=1, limit=1
                $region173: #{tpu_custom_call.1} parent=164 // loop_pre_header
                  _
                $region174: #{tpu_custom_call.1} parent=164 // loop_header
                  %s818 = sphi 0, %s822
                  %p819 = scmp.ge.s32.totalorder %s818, 1
                  %s823 = sphi %s659, %s659
                  %s824 = sphi %s782, %s782
                $region175: #{tpu_custom_call.1} parent=164 // loop_header_branch
                  %821 = sbr.rel (%p819) target = $region179
                $region176: #{tpu_custom_call.1} parent=164 // loop_body
                  %v825 = vld [vmem:[%s823] sm:$0xf]
                  %826 = vst [vmem:[%s824] sm:$0xf] %v825
                  %v827 = vld [vmem:[%s823 + $0x4] sm:$0xf]
                  %828 = vst [vmem:[%s824 + $0x8] sm:$0xf] %v827
                  %v829 = vld [vmem:[%s823 + $0x8] sm:$0xf]
                  %830 = vst [vmem:[%s824 + $0x10] sm:$0xf] %v829
                  %v831 = vld [vmem:[%s823 + $0xc] sm:$0xf]
                  %832 = vst [vmem:[%s824 + $0x18] sm:$0xf] %v831
                $region177: #{tpu_custom_call.1} parent=164 // loop_footer
                  %s822 = sadd.s32 1, %s818
                $region178: #{tpu_custom_call.1} parent=164 // loop_footer_branch
                  %817 = sbr.rel target = $region174
                $region179: #{tpu_custom_call.1} parent=164 // loop_exit
                  _
              $region165: #{tpu_custom_call.1} parent=149 // pred_fallthru
                _
            $region150: #{tpu_custom_call.1} parent=145 // pred_fallthru
              _
            // Predicated region
            $region151: #{tpu_custom_call.1} parent=145 // pred_check
              _
            $region152: #{tpu_custom_call.1} parent=145 // pred_check_branch
              %788 = sbr.rel (0) target = $region154
            $region153: #{tpu_custom_call.1} parent=145 // pred_region
              loop: start=0, step=1, limit=1
              $region155: #{tpu_custom_call.1} parent=153 // loop_pre_header
                _
              $region156: #{tpu_custom_call.1} parent=153 // loop_header
                %s791 = sphi 0, %s795
                %p792 = scmp.ge.s32.totalorder %s791, 1
                %s796 = sphi %s659, %s659
                %s797 = sphi %s782, %s782
              $region157: #{tpu_custom_call.1} parent=153 // loop_header_branch
                %794 = sbr.rel (%p792) target = $region161
              $region158: #{tpu_custom_call.1} parent=153 // loop_body
                %v798 = vld [vmem:[%s796] sm:$0xf]
                %799 = vst [vmem:[%s797] sm:$0xf] %v798
                %v800 = vld [vmem:[%s796 + $0x4] sm:$0xf]
                %801 = vst [vmem:[%s797 + $0x8] sm:$0xf] %v800
                %v802 = vld [vmem:[%s796 + $0x8] sm:$0xf]
                %803 = vst [vmem:[%s797 + $0x10] sm:$0xf] %v802
                %v804 = vld [vmem:[%s796 + $0xc] sm:$0xf]
                %805 = vst [vmem:[%s797 + $0x18] sm:$0xf] %v804
              $region159: #{tpu_custom_call.1} parent=153 // loop_footer
                %s795 = sadd.s32 1, %s791
              $region160: #{tpu_custom_call.1} parent=153 // loop_footer_branch
                %790 = sbr.rel target = $region156
              $region161: #{tpu_custom_call.1} parent=153 // loop_exit
                _
            $region154: #{tpu_custom_call.1} parent=145 // pred_fallthru
              _
          $region146: #{tpu_custom_call.1} parent=141 // pred_fallthru
            _
          %833 = vnop
        $region142: #{tpu_custom_call.1} parent=43 // pred_fallthru
          _
      $region44: #{tpu_custom_call.1} parent=5 // pred_fallthru
        _
      %p834 = scmp.le.s32.totalorder 2, %s19
      // Predicated region
      $region180: #{tpu_custom_call.1} parent=5 // pred_check
        %p835 = pneg %p834
      $region181: #{tpu_custom_call.1} parent=5 // pred_check_branch
        %837 = sbr.rel (%p835) target = $region183
      $region182: #{tpu_custom_call.1} parent=5 // pred_region
        %s838 = ssub.s32 %s19, 2
        // Predicated region
        $region184: #{tpu_custom_call.1} parent=182 // pred_check
          %p839 = pneg %p195
        $region185: #{tpu_custom_call.1} parent=182 // pred_check_branch
          %841 = sbr.rel (%p839) target = $region187
        $region186: #{tpu_custom_call.1} parent=182 // pred_region
          %s842 = sand.u32 %s180, 1
          %s843 = sand.u32 %s180, 1
          %s844 = smul.addr %s843, 16
          %s845 = scalar_lea.vmem [#allocation7], %s844
        $region187: #{tpu_custom_call.1} parent=182 // pred_fallthru
          _
        // Predicated region
        $region188: #{tpu_custom_call.1} parent=182 // pred_check
          %p846 = pneg %p223
        $region189: #{tpu_custom_call.1} parent=182 // pred_check_branch
          %848 = sbr.rel (%p846) target = $region191
        $region190: #{tpu_custom_call.1} parent=182 // pred_region
          %s849 = sand.u32 %s208, 1
          %s850 = sand.u32 %s208, 1
          %s851 = smul.addr %s850, 16
          %s852 = scalar_lea.vmem [#allocation8], %s851
        $region191: #{tpu_custom_call.1} parent=182 // pred_fallthru
          _
        // Predicated region
        $region192: #{tpu_custom_call.1} parent=182 // pred_check
          %p853 = pneg %p251
        $region193: #{tpu_custom_call.1} parent=182 // pred_check_branch
          %855 = sbr.rel (%p853) target = $region195
        $region194: #{tpu_custom_call.1} parent=182 // pred_region
          %s856 = sand.u32 %s236, 1
          %s857 = sand.u32 %s236, 1
          %s858 = smul.addr %s857, 16
          %s859 = scalar_lea.vmem [#allocation9], %s858
        $region195: #{tpu_custom_call.1} parent=182 // pred_fallthru
          _
      $region183: #{tpu_custom_call.1} parent=5 // pred_fallthru
        _
    $region6: #{tpu_custom_call.1} parent=1 // loop_footer
      %s23 = sadd.s32 1, %s19
    $region7: #{tpu_custom_call.1} parent=1 // loop_footer_branch
      %18 = sbr.rel target = $region3
    $region8: #{tpu_custom_call.1} parent=1 // loop_exit
      _
    %860 = vsyncpa [#allocation3], 1
    %s861 = scalar_lea.sflag [#allocation3], 1
    %862 = vsyncpa %s861, 1
    %863 = vsyncpa [#allocation5], 1

</llo_original>
